<compile_context>
chip_gen: v7x
topology: tpu7x:2x2x1
jax: 0.10.0
libtpu: 0.0.40
codegen_flags: <defaults>
</compile_context>

<pallas_src>
import functools

import jax
import jax.numpy as jnp
from jax.experimental import pallas as pl
from jax.experimental.pallas import tpu as pltpu

ALPHA = 0.1        # SSIM weight
CLIP_LOSS = 0.5    # clip at mean + clip_loss * std
C1 = 0.0001
C2 = 0.0009


def _round_up(v, m):
    return ((v + m - 1) // m) * m


def _photometric_kernel(x_ref, y_ref, out_ref, *, C, H, W, alpha, c1, c2):
    """Per-channel photometric loss for one batch element.

    x_ref, y_ref : [1, H_pad, CW_pad] warped / target image, channels packed
                   along the lane axis (native dtype, zero padded).
    out_ref      : [1, H_pad, CW_pad] f32 per-channel photometric loss:
                   alpha*clamp((1-SSIM_c)/2, 0, 1) + (1-alpha)*|x_c - y_c|.
    """
    _, H_pad, CW_pad = x_ref.shape
    inv9 = 1.0 / 9.0

    x = x_ref[0].astype(jnp.float32)   # [H_pad, CW_pad]
    y = y_ref[0].astype(jnp.float32)

    # Reflection masks (ReflectionPad2d(1)), shared by all five pools.
    # Channel segments live at lanes [c*W, (c+1)*W); padded lanes/rows beyond
    # the true extents hold garbage and are sliced off in the wrapper.
    lane = jax.lax.broadcasted_iota(jnp.int32, (H_pad, CW_pad), 1)
    row = jax.lax.broadcasted_iota(jnp.int32, (H_pad, CW_pad), 0)
    left_edge = lane == 0
    right_edge = lane == (W - 1)
    for c in range(1, C):
        left_edge = jnp.logical_or(left_edge, lane == c * W)
        right_edge = jnp.logical_or(right_edge, lane == c * W + (W - 1))
    top_edge = row == 0
    bot_edge = row == (H - 1)

    def rsum_lane(z):
        # 3-tap sum along W (lane axis) with per-channel-segment reflection.
        zr = pltpu.roll(z, shift=CW_pad - 1, axis=1)   # z[:, j+1] (wrapping)
        zl = pltpu.roll(z, shift=1, axis=1)            # z[:, j-1] (wrapping)
        right = jnp.where(right_edge, zl, zr)          # col W-1 reflects to W-2
        left = jnp.where(left_edge, zr, zl)            # col 0 reflects to 1
        return left + z + right

    def rsum_sub(z):
        # 3-tap sum along H (sublane axis) with reflection.
        zd = pltpu.roll(z, shift=H_pad - 1, axis=0)    # z[i+1, :] (wrapping)
        zu = pltpu.roll(z, shift=1, axis=0)            # z[i-1, :] (wrapping)
        bot = jnp.where(bot_edge, zu, zd)              # row H-1 reflects to H-2
        top = jnp.where(top_edge, zd, zu)              # row 0 reflects to 1
        return top + z + bot

    def pool(z):
        # AvgPool2d(3, stride=1) over the ReflectionPad2d(1)-padded image.
        return rsum_sub(rsum_lane(z)) * inv9

    # Products computed once per pixel; their pools are rolls + adds.
    mu_x = pool(x)
    mu_y = pool(y)
    mu_xx = mu_x * mu_x
    mu_yy = mu_y * mu_y
    mu_xy = mu_x * mu_y
    sigma_x = pool(x * x) - mu_xx
    sigma_y = pool(y * y) - mu_yy
    sigma_xy = pool(x * y) - mu_xy

    v1 = 2.0 * sigma_xy + c2
    v2 = sigma_x + sigma_y + c2
    ssim_n = (2.0 * mu_xy + c1) * v1
    ssim_d = (mu_xx + mu_yy + c1) * v2

    # Approximate reciprocal (EUP slot) + one Newton-Raphson refinement step
    # keeps the divide off the VALU at ~f32 accuracy (ssim_d is bounded away
    # from zero by the C1/C2 regularizers).
    r = pl.reciprocal(ssim_d, approx=True)
    r = r * (2.0 - ssim_d * r)
    ssim = ssim_n * r

    ssim_loss = jnp.clip((1.0 - ssim) * 0.5, 0.0, 1.0)
    l1 = jnp.abs(x - y)
    out_ref[0] = (alpha * ssim_loss + (1.0 - alpha) * l1).astype(out_ref.dtype)


@functools.partial(jax.jit, static_argnames=("alpha", "c1", "c2"))
def photometric_map(t_est, image, *, alpha=ALPHA, c1=C1, c2=C2):
    """Pallas-computed photometric loss map [B, 1, H, W] (pre-clipping)."""
    B, C, H, W = t_est.shape
    assert t_est.shape == image.shape
    assert H >= 2 and W >= 2, "ReflectionPad2d(1) needs H, W >= 2"
    CW = C * W
    itemsize = jnp.dtype(t_est.dtype).itemsize

    # Lane-dense layout: pack channels along the lane axis and zero-pad to an
    # (8, 128)-aligned slab (padding is inert: reflection masks never read it
    # and padded outputs are sliced off below).
    H_pad = _round_up(H, 8)
    CW_pad = _round_up(CW, 128)
    xp = jnp.transpose(t_est, (0, 2, 1, 3)).reshape(B, H, CW)
    yp = jnp.transpose(image, (0, 2, 1, 3)).reshape(B, H, CW)
    xp = jnp.pad(xp, ((0, 0), (0, H_pad - H), (0, CW_pad - CW)))
    yp = jnp.pad(yp, ((0, 0), (0, H_pad - H), (0, CW_pad - CW)))

    kernel = functools.partial(
        _photometric_kernel, C=C, H=H, W=W,
        alpha=float(alpha), c1=float(c1), c2=float(c2))

    # Generation-aware VMEM budget: double-buffered inputs/output + live f32
    # temporaries, capped at 75% of physical VMEM (v7x 64 MiB, v5e/v6e 128).
    try:
        vmem_cap = int(pltpu.get_tpu_info().vmem_capacity_bytes)
    except Exception:
        vmem_cap = 64 << 20
    block_bytes = H_pad * CW_pad * itemsize
    need = 4 * block_bytes + 2 * H_pad * CW_pad * 4 + 24 * H_pad * CW_pad * 4
    vmem_limit = int(min(max(need + (2 << 20), 32 << 20), (vmem_cap * 3) // 4))

    cost = pl.CostEstimate(
        flops=80 * B * C * H * W,
        transcendentals=B * C * H * W,
        bytes_accessed=2 * B * C * H * W * itemsize + B * C * H * W * 4)

    per_chan = pl.pallas_call(
        kernel,
        out_shape=jax.ShapeDtypeStruct((B, H_pad, CW_pad), jnp.float32),
        grid_spec=pltpu.PrefetchScalarGridSpec(
            num_scalar_prefetch=0,
            grid=(B,),
            in_specs=[
                pl.BlockSpec((1, H_pad, CW_pad), lambda b: (b, 0, 0)),
                pl.BlockSpec((1, H_pad, CW_pad), lambda b: (b, 0, 0)),
            ],
            out_specs=pl.BlockSpec((1, H_pad, CW_pad), lambda b: (b, 0, 0)),
        ),
        compiler_params=pltpu.CompilerParams(
            dimension_semantics=("parallel",),
            vmem_limit_bytes=vmem_limit),
        cost_estimate=cost,
    )(xp, yp)

    # Tiny channel mean in the wrapper keeps the kernel's stores lane-dense.
    pm = per_chan[:, :H, :CW].reshape(B, H, C, W).mean(axis=2)
    return pm[:, None, :, :]


def photometric_loss(t_est_list, images_list, *, alpha=ALPHA,
                     clip_loss=CLIP_LOSS, c1=C1, c2=C2):
    """Matches PhotometricLoss.forward: list of [B,1,H,W] loss maps."""
    assert len(t_est_list) == len(images_list)
    out = []
    for te, im in zip(t_est_list, images_list):
        pm = photometric_map(te, im, alpha=alpha, c1=c1, c2=c2)
        if clip_loss > 0.0:
            # Global mean/std (torch.std is unbiased, ddof=1) + clamp(max=...)
            # kept in plain JAX — tiny cross-batch reduction.
            mean = jnp.mean(pm)
            std = jnp.std(pm, ddof=1)
            pm = jnp.minimum(pm, mean + clip_loss * std)
        out.append(pm)
    return out


# ----------------------------- pure-JAX reference -----------------------------
def _ref_photometric(te, im, alpha, clip_loss, c1, c2):
    pad = ((0, 0), (0, 0), (1, 1), (1, 1))
    xp = jnp.pad(te.astype(jnp.float32), pad, mode="reflect")
    yp = jnp.pad(im.astype(jnp.float32), pad, mode="reflect")

    def pool(z):
        s = jax.lax.reduce_window(z, 0.0, jax.lax.add,
                                  (1, 1, 3, 3), (1, 1, 1, 1), "VALID")
        return s / 9.0

    mu_x, mu_y = pool(xp), pool(yp)
    sigma_x = pool(xp * xp) - mu_x ** 2
    sigma_y = pool(yp * yp) - mu_y ** 2
    sigma_xy = pool(xp * yp) - mu_x * mu_y
    v1 = 2.0 * sigma_xy + c2
    v2 = sigma_x + sigma_y + c2
    ssim = ((2.0 * mu_x * mu_y + c1) * v1) / ((mu_x ** 2 + mu_y ** 2 + c1) * v2)
    ssim_loss = jnp.clip((1.0 - ssim) / 2.0, 0.0, 1.0)
    l1 = jnp.abs(te.astype(jnp.float32) - im.astype(jnp.float32))
    pm = (alpha * jnp.mean(ssim_loss, axis=1, keepdims=True)
          + (1.0 - alpha) * jnp.mean(l1, axis=1, keepdims=True))
    if clip_loss > 0.0:
        pm = jnp.minimum(pm, jnp.mean(pm) + clip_loss * jnp.std(pm, ddof=1))
    return pm


if __name__ == "__main__":
    key = jax.random.PRNGKey(0)
    k0, k1, k2, k3 = jax.random.split(key, 4)

    B = 2
    # Two "scales", as the module takes lists of multi-scale images.
    t_est = [
        jax.random.uniform(k0, (B, 3, 16, 16), dtype=jnp.float32),
        jax.random.uniform(k1, (B, 3, 8, 8), dtype=jnp.float32),
    ]
    images = [
        jax.random.uniform(k2, (B, 3, 16, 16), dtype=jnp.float32),
        jax.random.uniform(k3, (B, 3, 8, 8), dtype=jnp.float32),
    ]

    out = photometric_loss(t_est, images)
    out = [jax.block_until_ready(o) for o in out]

    # Validate against a pure-JAX reference.
    for i in range(len(out)):
        ref = _ref_photometric(t_est[i], images[i], ALPHA, CLIP_LOSS, C1, C2)
        assert out[i].shape == (B, 1, t_est[i].shape[2], t_est[i].shape[3])
        if not jnp.allclose(out[i], ref, atol=1e-5, rtol=1e-5):
            err = float(jnp.max(jnp.abs(out[i] - ref)))
            raise AssertionError(f"mismatch at scale {i}: max abs err {err}")

    print("KERNEL_OK")
</pallas_src>

<mosaic_0001>
module attributes {stable_mosaic.version = 11 : i64} {
  func.func @_photometric_kernel(%arg0: i32, %arg1: memref<1x16x128xf32, #tpu.memory_space<vmem>>, %arg2: memref<1x16x128xf32, #tpu.memory_space<vmem>>, %arg3: memref<1x16x128xf32, #tpu.memory_space<vmem>>) attributes {dimension_semantics = [#tpu.dimension_semantics<parallel>], iteration_bounds = array<i64: 2>, scalar_prefetch = 0 : i64, scratch_operands = 0 : i64, tpu.core_type = #tpu.core_type<tc>, window_params = [{transform_indices = @transform_0, window_bounds = array<i64: 1, 16, 128>}, {transform_indices = @transform_1, window_bounds = array<i64: 1, 16, 128>}, {transform_indices = @transform_2, window_bounds = array<i64: 1, 16, 128>}]} {
    %c0 = arith.constant 0 : index
    %c0_0 = arith.constant 0 : index
    %c0_1 = arith.constant 0 : index
    %0 = vector.load %arg1[%c0, %c0_0, %c0_1] : memref<1x16x128xf32, #tpu.memory_space<vmem>>, vector<1x16x128xf32>
    %1 = vector.shape_cast %0 : vector<1x16x128xf32> to vector<16x128xf32>
    %c0_2 = arith.constant 0 : index
    %c0_3 = arith.constant 0 : index
    %c0_4 = arith.constant 0 : index
    %2 = vector.load %arg2[%c0_2, %c0_3, %c0_4] : memref<1x16x128xf32, #tpu.memory_space<vmem>>, vector<1x16x128xf32>
    %3 = vector.shape_cast %2 : vector<1x16x128xf32> to vector<16x128xf32>
    %4 = tpu.iota {dimensions = array<i32: 1>} : vector<16x128xi32>
    %5 = tpu.iota {dimensions = array<i32: 0>} : vector<16x128xi32>
    %c0_i32 = arith.constant 0 : i32
    %6 = vector.broadcast %c0_i32 : i32 to vector<16x128xi32>
    %7 = arith.cmpi eq, %4, %6 : vector<16x128xi32>
    %c15_i32 = arith.constant 15 : i32
    %8 = vector.broadcast %c15_i32 : i32 to vector<16x128xi32>
    %9 = arith.cmpi eq, %4, %8 : vector<16x128xi32>
    %c16_i32 = arith.constant 16 : i32
    %10 = vector.broadcast %c16_i32 : i32 to vector<16x128xi32>
    %11 = arith.cmpi eq, %4, %10 : vector<16x128xi32>
    %12 = arith.ori %7, %11 : vector<16x128xi1>
    %c31_i32 = arith.constant 31 : i32
    %13 = vector.broadcast %c31_i32 : i32 to vector<16x128xi32>
    %14 = arith.cmpi eq, %4, %13 : vector<16x128xi32>
    %15 = arith.ori %9, %14 : vector<16x128xi1>
    %c32_i32 = arith.constant 32 : i32
    %16 = vector.broadcast %c32_i32 : i32 to vector<16x128xi32>
    %17 = arith.cmpi eq, %4, %16 : vector<16x128xi32>
    %18 = arith.ori %12, %17 : vector<16x128xi1>
    %c47_i32 = arith.constant 47 : i32
    %19 = vector.broadcast %c47_i32 : i32 to vector<16x128xi32>
    %20 = arith.cmpi eq, %4, %19 : vector<16x128xi32>
    %21 = arith.ori %15, %20 : vector<16x128xi1>
    %c0_i32_5 = arith.constant 0 : i32
    %22 = vector.broadcast %c0_i32_5 : i32 to vector<16x128xi32>
    %23 = arith.cmpi eq, %5, %22 : vector<16x128xi32>
    %c15_i32_6 = arith.constant 15 : i32
    %24 = vector.broadcast %c15_i32_6 : i32 to vector<16x128xi32>
    %25 = arith.cmpi eq, %5, %24 : vector<16x128xi32>
    %c127_i32 = arith.constant 127 : i32
    %26 = tpu.dynamic_rotate %1 by %c127_i32 dim 1 : vector<16x128xf32>, i32 -> vector<16x128xf32>
    %c1_i32 = arith.constant 1 : i32
    %27 = tpu.dynamic_rotate %1 by %c1_i32 dim 1 : vector<16x128xf32>, i32 -> vector<16x128xf32>
    %28 = arith.select %21, %27, %26 : vector<16x128xi1>, vector<16x128xf32>
    %29 = arith.select %18, %26, %27 : vector<16x128xi1>, vector<16x128xf32>
    %30 = arith.addf %29, %1 : vector<16x128xf32>
    %31 = arith.addf %30, %28 : vector<16x128xf32>
    %c15_i32_7 = arith.constant 15 : i32
    %32 = tpu.dynamic_rotate %31 by %c15_i32_7 dim 0 : vector<16x128xf32>, i32 -> vector<16x128xf32>
    %c1_i32_8 = arith.constant 1 : i32
    %33 = tpu.dynamic_rotate %31 by %c1_i32_8 dim 0 : vector<16x128xf32>, i32 -> vector<16x128xf32>
    %34 = arith.select %25, %33, %32 : vector<16x128xi1>, vector<16x128xf32>
    %35 = arith.select %23, %32, %33 : vector<16x128xi1>, vector<16x128xf32>
    %36 = arith.addf %35, %31 : vector<16x128xf32>
    %37 = arith.addf %36, %34 : vector<16x128xf32>
    %cst = arith.constant 0.111111112 : f32
    %38 = vector.broadcast %cst : f32 to vector<16x128xf32>
    %39 = arith.mulf %37, %38 : vector<16x128xf32>
    %c127_i32_9 = arith.constant 127 : i32
    %40 = tpu.dynamic_rotate %3 by %c127_i32_9 dim 1 : vector<16x128xf32>, i32 -> vector<16x128xf32>
    %c1_i32_10 = arith.constant 1 : i32
    %41 = tpu.dynamic_rotate %3 by %c1_i32_10 dim 1 : vector<16x128xf32>, i32 -> vector<16x128xf32>
    %42 = arith.select %21, %41, %40 : vector<16x128xi1>, vector<16x128xf32>
    %43 = arith.select %18, %40, %41 : vector<16x128xi1>, vector<16x128xf32>
    %44 = arith.addf %43, %3 : vector<16x128xf32>
    %45 = arith.addf %44, %42 : vector<16x128xf32>
    %c15_i32_11 = arith.constant 15 : i32
    %46 = tpu.dynamic_rotate %45 by %c15_i32_11 dim 0 : vector<16x128xf32>, i32 -> vector<16x128xf32>
    %c1_i32_12 = arith.constant 1 : i32
    %47 = tpu.dynamic_rotate %45 by %c1_i32_12 dim 0 : vector<16x128xf32>, i32 -> vector<16x128xf32>
    %48 = arith.select %25, %47, %46 : vector<16x128xi1>, vector<16x128xf32>
    %49 = arith.select %23, %46, %47 : vector<16x128xi1>, vector<16x128xf32>
    %50 = arith.addf %49, %45 : vector<16x128xf32>
    %51 = arith.addf %50, %48 : vector<16x128xf32>
    %cst_13 = arith.constant 0.111111112 : f32
    %52 = vector.broadcast %cst_13 : f32 to vector<16x128xf32>
    %53 = arith.mulf %51, %52 : vector<16x128xf32>
    %54 = arith.mulf %39, %39 : vector<16x128xf32>
    %55 = arith.mulf %53, %53 : vector<16x128xf32>
    %56 = arith.mulf %39, %53 : vector<16x128xf32>
    %57 = arith.mulf %1, %1 : vector<16x128xf32>
    %c127_i32_14 = arith.constant 127 : i32
    %58 = tpu.dynamic_rotate %57 by %c127_i32_14 dim 1 : vector<16x128xf32>, i32 -> vector<16x128xf32>
    %c1_i32_15 = arith.constant 1 : i32
    %59 = tpu.dynamic_rotate %57 by %c1_i32_15 dim 1 : vector<16x128xf32>, i32 -> vector<16x128xf32>
    %60 = arith.select %21, %59, %58 : vector<16x128xi1>, vector<16x128xf32>
    %61 = arith.select %18, %58, %59 : vector<16x128xi1>, vector<16x128xf32>
    %62 = arith.addf %61, %57 : vector<16x128xf32>
    %63 = arith.addf %62, %60 : vector<16x128xf32>
    %c15_i32_16 = arith.constant 15 : i32
    %64 = tpu.dynamic_rotate %63 by %c15_i32_16 dim 0 : vector<16x128xf32>, i32 -> vector<16x128xf32>
    %c1_i32_17 = arith.constant 1 : i32
    %65 = tpu.dynamic_rotate %63 by %c1_i32_17 dim 0 : vector<16x128xf32>, i32 -> vector<16x128xf32>
    %66 = arith.select %25, %65, %64 : vector<16x128xi1>, vector<16x128xf32>
    %67 = arith.select %23, %64, %65 : vector<16x128xi1>, vector<16x128xf32>
    %68 = arith.addf %67, %63 : vector<16x128xf32>
    %69 = arith.addf %68, %66 : vector<16x128xf32>
    %cst_18 = arith.constant 0.111111112 : f32
    %70 = vector.broadcast %cst_18 : f32 to vector<16x128xf32>
    %71 = arith.mulf %69, %70 : vector<16x128xf32>
    %72 = arith.subf %71, %54 : vector<16x128xf32>
    %73 = arith.mulf %3, %3 : vector<16x128xf32>
    %c127_i32_19 = arith.constant 127 : i32
    %74 = tpu.dynamic_rotate %73 by %c127_i32_19 dim 1 : vector<16x128xf32>, i32 -> vector<16x128xf32>
    %c1_i32_20 = arith.constant 1 : i32
    %75 = tpu.dynamic_rotate %73 by %c1_i32_20 dim 1 : vector<16x128xf32>, i32 -> vector<16x128xf32>
    %76 = arith.select %21, %75, %74 : vector<16x128xi1>, vector<16x128xf32>
    %77 = arith.select %18, %74, %75 : vector<16x128xi1>, vector<16x128xf32>
    %78 = arith.addf %77, %73 : vector<16x128xf32>
    %79 = arith.addf %78, %76 : vector<16x128xf32>
    %c15_i32_21 = arith.constant 15 : i32
    %80 = tpu.dynamic_rotate %79 by %c15_i32_21 dim 0 : vector<16x128xf32>, i32 -> vector<16x128xf32>
    %c1_i32_22 = arith.constant 1 : i32
    %81 = tpu.dynamic_rotate %79 by %c1_i32_22 dim 0 : vector<16x128xf32>, i32 -> vector<16x128xf32>
    %82 = arith.select %25, %81, %80 : vector<16x128xi1>, vector<16x128xf32>
    %83 = arith.select %23, %80, %81 : vector<16x128xi1>, vector<16x128xf32>
    %84 = arith.addf %83, %79 : vector<16x128xf32>
    %85 = arith.addf %84, %82 : vector<16x128xf32>
    %cst_23 = arith.constant 0.111111112 : f32
    %86 = vector.broadcast %cst_23 : f32 to vector<16x128xf32>
    %87 = arith.mulf %85, %86 : vector<16x128xf32>
    %88 = arith.subf %87, %55 : vector<16x128xf32>
    %89 = arith.mulf %1, %3 : vector<16x128xf32>
    %c127_i32_24 = arith.constant 127 : i32
    %90 = tpu.dynamic_rotate %89 by %c127_i32_24 dim 1 : vector<16x128xf32>, i32 -> vector<16x128xf32>
    %c1_i32_25 = arith.constant 1 : i32
    %91 = tpu.dynamic_rotate %89 by %c1_i32_25 dim 1 : vector<16x128xf32>, i32 -> vector<16x128xf32>
    %92 = arith.select %21, %91, %90 : vector<16x128xi1>, vector<16x128xf32>
    %93 = arith.select %18, %90, %91 : vector<16x128xi1>, vector<16x128xf32>
    %94 = arith.addf %93, %89 : vector<16x128xf32>
    %95 = arith.addf %94, %92 : vector<16x128xf32>
    %c15_i32_26 = arith.constant 15 : i32
    %96 = tpu.dynamic_rotate %95 by %c15_i32_26 dim 0 : vector<16x128xf32>, i32 -> vector<16x128xf32>
    %c1_i32_27 = arith.constant 1 : i32
    %97 = tpu.dynamic_rotate %95 by %c1_i32_27 dim 0 : vector<16x128xf32>, i32 -> vector<16x128xf32>
    %98 = arith.select %25, %97, %96 : vector<16x128xi1>, vector<16x128xf32>
    %99 = arith.select %23, %96, %97 : vector<16x128xi1>, vector<16x128xf32>
    %100 = arith.addf %99, %95 : vector<16x128xf32>
    %101 = arith.addf %100, %98 : vector<16x128xf32>
    %cst_28 = arith.constant 0.111111112 : f32
    %102 = vector.broadcast %cst_28 : f32 to vector<16x128xf32>
    %103 = arith.mulf %101, %102 : vector<16x128xf32>
    %104 = arith.subf %103, %56 : vector<16x128xf32>
    %cst_29 = arith.constant 2.000000e+00 : f32
    %105 = vector.broadcast %cst_29 : f32 to vector<16x128xf32>
    %106 = arith.mulf %105, %104 : vector<16x128xf32>
    %cst_30 = arith.constant 8.99999984E-4 : f32
    %107 = vector.broadcast %cst_30 : f32 to vector<16x128xf32>
    %108 = arith.addf %106, %107 : vector<16x128xf32>
    %109 = arith.addf %72, %88 : vector<16x128xf32>
    %cst_31 = arith.constant 8.99999984E-4 : f32
    %110 = vector.broadcast %cst_31 : f32 to vector<16x128xf32>
    %111 = arith.addf %109, %110 : vector<16x128xf32>
    %cst_32 = arith.constant 2.000000e+00 : f32
    %112 = vector.broadcast %cst_32 : f32 to vector<16x128xf32>
    %113 = arith.mulf %112, %56 : vector<16x128xf32>
    %cst_33 = arith.constant 9.99999974E-5 : f32
    %114 = vector.broadcast %cst_33 : f32 to vector<16x128xf32>
    %115 = arith.addf %113, %114 : vector<16x128xf32>
    %116 = arith.mulf %115, %108 : vector<16x128xf32>
    %117 = arith.addf %54, %55 : vector<16x128xf32>
    %cst_34 = arith.constant 9.99999974E-5 : f32
    %118 = vector.broadcast %cst_34 : f32 to vector<16x128xf32>
    %119 = arith.addf %117, %118 : vector<16x128xf32>
    %120 = arith.mulf %119, %111 : vector<16x128xf32>
    %121 = tpu.reciprocal %120 {approx = true} : vector<16x128xf32> -> vector<16x128xf32>
    %122 = arith.mulf %120, %121 : vector<16x128xf32>
    %cst_35 = arith.constant 2.000000e+00 : f32
    %123 = vector.broadcast %cst_35 : f32 to vector<16x128xf32>
    %124 = arith.subf %123, %122 : vector<16x128xf32>
    %125 = arith.mulf %121, %124 : vector<16x128xf32>
    %126 = arith.mulf %116, %125 : vector<16x128xf32>
    %cst_36 = arith.constant 1.000000e+00 : f32
    %127 = vector.broadcast %cst_36 : f32 to vector<16x128xf32>
    %128 = arith.subf %127, %126 : vector<16x128xf32>
    %cst_37 = arith.constant 5.000000e-01 : f32
    %129 = vector.broadcast %cst_37 : f32 to vector<16x128xf32>
    %130 = arith.mulf %128, %129 : vector<16x128xf32>
    %cst_38 = arith.constant 0.000000e+00 : f32
    %cst_39 = arith.constant 1.000000e+00 : f32
    %131 = vector.broadcast %cst_38 : f32 to vector<16x128xf32>
    %132 = arith.maximumf %131, %130 : vector<16x128xf32>
    %133 = vector.broadcast %cst_39 : f32 to vector<16x128xf32>
    %134 = arith.minimumf %133, %132 : vector<16x128xf32>
    %135 = arith.subf %1, %3 : vector<16x128xf32>
    %136 = math.absf %135 : vector<16x128xf32>
    %cst_40 = arith.constant 1.000000e-01 : f32
    %137 = vector.broadcast %cst_40 : f32 to vector<16x128xf32>
    %138 = arith.mulf %137, %134 : vector<16x128xf32>
    %cst_41 = arith.constant 0.899999976 : f32
    %139 = vector.broadcast %cst_41 : f32 to vector<16x128xf32>
    %140 = arith.mulf %139, %136 : vector<16x128xf32>
    %141 = arith.addf %138, %140 : vector<16x128xf32>
    %c0_42 = arith.constant 0 : index
    %c0_43 = arith.constant 0 : index
    %c0_44 = arith.constant 0 : index
    %142 = vector.load %arg3[%c0_42, %c0_43, %c0_44] : memref<1x16x128xf32, #tpu.memory_space<vmem>>, vector<1x16x128xf32>
    %143 = vector.shape_cast %142 : vector<1x16x128xf32> to vector<16x128xf32>
    %144 = vector.shape_cast %141 : vector<16x128xf32> to vector<1x16x128xf32>
    tpu.vector_store %arg3[%c0_42, %c0_43, %c0_44], %144 {strides = array<i32>} : memref<1x16x128xf32, #tpu.memory_space<vmem>>, vector<1x16x128xf32>,
    return
  }
  func.func @transform_0(%arg0: i32) -> (i32, i32, i32) {
    %c0_i32 = arith.constant 0 : i32
    %c0_i32_0 = arith.constant 0 : i32
    %c0_i32_1 = arith.constant 0 : i32
    return %arg0, %c0_i32, %c0_i32_0 : i32, i32, i32
  }
  func.func @transform_1(%arg0: i32) -> (i32, i32, i32) {
    %c0_i32 = arith.constant 0 : i32
    %c0_i32_0 = arith.constant 0 : i32
    %c0_i32_1 = arith.constant 0 : i32
    return %arg0, %c0_i32, %c0_i32_0 : i32, i32, i32
  }
  func.func @transform_2(%arg0: i32) -> (i32, i32, i32) {
    %c0_i32 = arith.constant 0 : i32
    %c0_i32_0 = arith.constant 0 : i32
    %c0_i32_1 = arith.constant 0 : i32
    return %arg0, %c0_i32, %c0_i32_0 : i32, i32, i32
  }
}

</mosaic_0001>

<llo_original>
// kernel: photometric_map.1
$region0: #{photometric_map.1}
  #allocation0 [shape = 'u32[]', space=smem, size = 0x4, offset = 0x4, fixed_abs, tag = 'smem constant byte address 0x4 - core index']
  #allocation1 [shape = 'u32[144,128]{1,0:T(1,128)}', space=vmem, size = 0x12000, scoped, tag = 'internal scratch']
  %s0 = inlined_call_operand.vmem [shape: f32[2,16,128], index: 0, kind: input, shape index: {}]
  %s1 = inlined_call_operand.vmem [shape: f32[2,16,128], index: 1, kind: input, shape index: {}]
  %s2 = inlined_call_operand.vmem [shape: f32[2,16,128], index: 2, kind: output, shape index: {}]
  %s3 = sld [smem:[#allocation0]]
  $region41: #{photometric_map.1} parent=0
    _
  %s5 = ssub.s32 1, %s3
  %s6 = scalar_select 0, %s5, %s3
  loop: start=0, step=1, limit=4
  $region2: #{photometric_map.1} parent=0 // loop_pre_header
    _
  $region3: #{photometric_map.1} parent=0 // loop_header
    %s8 = sphi 0, %s12
    %p9 = scmp.ge.s32.totalorder %s8, 4
    %s18 = sphi 0, %s20
    %s21 = sphi 0, %s18
    %s22 = sphi 0, %s21
    %s38 = sphi 0, %s22
    %s44 = sphi 0, %s46
    %s47 = sphi 0, %s44
    %s48 = sphi 0, %s47
    %s64 = sphi 0, %s48
    %s70 = sphi 0, %s72
    %s73 = sphi 0, %s70
    %s74 = sphi 0, %s73
    %s90 = sphi 0, %s74
  $region4: #{photometric_map.1} parent=0 // loop_header_branch
    %11 = sbr.rel (%p9) target = $region8
  $region5: #{photometric_map.1} parent=0 // loop_body
    %s13 = ssub.s32 %s8, 1
    %s14 = ssub.s32 %s8, 2
    %s15 = sadd.s32 %s8, 1
    %s16 = ssub.s32 %s8, %s15
    %p17 = scmp.eq.s32.totalorder %s16, 0
    %s19 = sadd.s32 %s18, 1
    %s20 = scalar_select %p17, %s18, %s19
    %p23 = pneg %p17
    %p24 = scmp.eq.s32.totalorder %s8, 1
    %p25 = por %p23, %p24
    %p26 = scmp.ne.s32.totalorder %s18, %s21
    %p27 = scmp.eq.s32.totalorder %s8, 0
    %p28 = por %p26, %p27
    %p29 = scmp.ne.s32.totalorder %s18, %s21
    %p30 = scmp.eq.s32.totalorder %s13, 1
    %p31 = por %p29, %p30
    %p32 = scmp.ne.s32.totalorder %s21, %s22
    %p33 = scmp.eq.s32.totalorder %s13, 0
    %p34 = por %p32, %p33
    %p35 = scmp.ne.s32.totalorder %s21, %s22
    %p36 = scmp.eq.s32.totalorder %s14, 1
    %p37 = por %p35, %p36
    %p39 = scmp.ne.s32.totalorder %s22, %s38
    %p40 = scmp.eq.s32.totalorder %s14, 0
    %p41 = por %p39, %p40
    %s42 = ssub.s32 %s8, %s15
    %p43 = scmp.eq.s32.totalorder %s42, 0
    %s45 = sadd.s32 %s44, 1
    %s46 = scalar_select %p43, %s44, %s45
    %p49 = pneg %p43
    %p50 = scmp.eq.s32.totalorder %s8, 1
    %p51 = por %p49, %p50
    %p52 = scmp.ne.s32.totalorder %s44, %s47
    %p53 = scmp.eq.s32.totalorder %s8, 0
    %p54 = por %p52, %p53
    %p55 = scmp.ne.s32.totalorder %s44, %s47
    %p56 = scmp.eq.s32.totalorder %s13, 1
    %p57 = por %p55, %p56
    %p58 = scmp.ne.s32.totalorder %s47, %s48
    %p59 = scmp.eq.s32.totalorder %s13, 0
    %p60 = por %p58, %p59
    %p61 = scmp.ne.s32.totalorder %s47, %s48
    %p62 = scmp.eq.s32.totalorder %s14, 1
    %p63 = por %p61, %p62
    %p65 = scmp.ne.s32.totalorder %s48, %s64
    %p66 = scmp.eq.s32.totalorder %s14, 0
    %p67 = por %p65, %p66
    %s68 = ssub.s32 %s8, %s15
    %p69 = scmp.eq.s32.totalorder %s68, 0
    %s71 = sadd.s32 %s70, 1
    %s72 = scalar_select %p69, %s70, %s71
    %p75 = pneg %p69
    %p76 = scmp.eq.s32.totalorder %s8, 1
    %p77 = por %p75, %p76
    %p78 = scmp.ne.s32.totalorder %s70, %s73
    %p79 = scmp.eq.s32.totalorder %s8, 0
    %p80 = por %p78, %p79
    %p81 = scmp.ne.s32.totalorder %s70, %s73
    %p82 = scmp.eq.s32.totalorder %s13, 1
    %p83 = por %p81, %p82
    %p84 = scmp.ne.s32.totalorder %s73, %s74
    %p85 = scmp.eq.s32.totalorder %s13, 0
    %p86 = por %p84, %p85
    %p87 = scmp.ne.s32.totalorder %s73, %s74
    %p88 = scmp.eq.s32.totalorder %s14, 1
    %p89 = por %p87, %p88
    %p91 = scmp.ne.s32.totalorder %s74, %s90
    %p92 = scmp.eq.s32.totalorder %s14, 0
    %p93 = por %p91, %p92
    %p94 = scmp.le.s32.totalorder 1, %s8
    %p95 = scmp.lt.s32.totalorder %s8, 3
    %p96 = pnand %p94, %p95
    %p97 = pneg %p96
    // Predicated region
    $region9: #{photometric_map.1} parent=5 // pred_check
      _
    $region10: #{photometric_map.1} parent=5 // pred_check_branch
      %99 = sbr.rel (%p96) target = $region12
    $region11: #{photometric_map.1} parent=5 // pred_region
      %s100 = ssub.s32 %s8, 1
    $region12: #{photometric_map.1} parent=5 // pred_fallthru
      _
    %p101 = scmp.lt.s32.totalorder %s8, 2
    // Predicated region
    $region13: #{photometric_map.1} parent=5 // pred_check
      %p102 = pneg %p101
    $region14: #{photometric_map.1} parent=5 // pred_check_branch
      %104 = sbr.rel (%p102) target = $region16
    $region15: #{photometric_map.1} parent=5 // pred_region
      // Predicated region
      $region17: #{photometric_map.1} parent=15 // pred_check
        %p105 = pneg %p28
      $region18: #{photometric_map.1} parent=15 // pred_check_branch
        %107 = sbr.rel (%p105) target = $region20
      $region19: #{photometric_map.1} parent=15 // pred_region
        %p108 = scmp.lt.s32.totalorder %s8, 1
        %s109 = scalar_select %p108, %s8, 1
        %s110 = smul.addr %s109, 2
        %s111 = smul.addr %s110, 8
        %s112 = scalar_lea.vmem %s0, %s111
      $region20: #{photometric_map.1} parent=15 // pred_fallthru
        _
      // Predicated region
      $region21: #{photometric_map.1} parent=15 // pred_check
        %p113 = pneg %p54
      $region22: #{photometric_map.1} parent=15 // pred_check_branch
        %115 = sbr.rel (%p113) target = $region24
      $region23: #{photometric_map.1} parent=15 // pred_region
        %p116 = scmp.lt.s32.totalorder %s8, 1
        %s117 = scalar_select %p116, %s8, 1
        %s118 = smul.addr %s117, 2
        %s119 = smul.addr %s118, 8
        %s120 = scalar_lea.vmem %s1, %s119
      $region24: #{photometric_map.1} parent=15 // pred_fallthru
        _
    $region16: #{photometric_map.1} parent=5 // pred_fallthru
      _
    %p121 = scmp.le.s32.totalorder 1, %s8
    %p122 = scmp.lt.s32.totalorder %s8, 3
    %p123 = pnand %p121, %p122
    %p124 = pneg %p123
    // Predicated region
    $region25: #{photometric_map.1} parent=5 // pred_check
      _
    $region26: #{photometric_map.1} parent=5 // pred_check_branch
      %126 = sbr.rel (%p123) target = $region28
    $region27: #{photometric_map.1} parent=5 // pred_region
      %s127 = ssub.s32 %s8, 1
      %p128 = scmp.lt.s32.totalorder %s13, 1
      %s129 = scalar_select %p128, %s13, 1
      %s130 = smul.addr %s129, 2
      %s131 = smul.addr %s130, 8
      %s132 = scalar_lea.vmem %s0, %s131
      %p133 = pneg %p34
      %p134 = pneg %p31
      %p135 = scmp.lt.s32.totalorder %s13, 1
      %s136 = scalar_select %p135, %s13, 1
      %s137 = smul.addr %s136, 2
      %s138 = smul.addr %s137, 8
      %s139 = scalar_lea.vmem %s1, %s138
      %p140 = pneg %p60
      %p141 = pneg %p57
      %p142 = pneg %p86
      %p143 = pneg %p83
      %p144 = scmp.lt.s32.totalorder %s13, 1
      %s145 = scalar_select %p144, %s13, 1
      %s146 = smul.addr %s145, 2
      %s147 = smul.addr %s146, 8
      %s148 = scalar_lea.vmem %s2, %s147
      %p149 = scmp.lt.s32.totalorder %s13, 1
      %s150 = scalar_select %p149, %s13, 1
      %s151 = smul.addr %s150, 2
      %s152 = smul.addr %s151, 8
      %s153 = scalar_lea.vmem %s0, %s152
      %p154 = scmp.lt.s32.totalorder %s13, 1
      %s155 = scalar_select %p154, %s13, 1
      %s156 = smul.addr %s155, 2
      %s157 = smul.addr %s156, 8
      %s158 = scalar_lea.vmem %s1, %s157
      %p159 = scmp.lt.s32.totalorder %s13, 1
      %s160 = scalar_select %p159, %s13, 1
      %s161 = smul.addr %s160, 2
      %s162 = smul.addr %s161, 8
      %s163 = scalar_lea.vmem %s2, %s162
      %v164 = vld [vmem:[%s153] sm:$0xff]
      %v165 = vld [vmem:[%s153 + $0x8] sm:$0xff]
      %v166 = vld [vmem:[%s158] sm:$0xff]
      %v167 = vld [vmem:[%s158 + $0x8] sm:$0xff]
      %v168 = vlaneseq
      %v169 = vand.u32 %v168, 127
      %v170 = vlaneseq
      %v171 = vshrl.u32 %v170, 7
      %v172 = vadd.s32 %v171, 8
      %vm173 = vcmp.eq.s32.totalorder %v169, 0
      %vm174 = vcmp.eq.s32.totalorder %v169, 15
      %vm175 = vcmp.eq.s32.totalorder %v169, 16
      %vm176 = vmor %vm173, %vm175
      %vm177 = vcmp.eq.s32.totalorder %v169, 31
      %vm178 = vmor %vm174, %vm177
      %vm179 = vcmp.eq.s32.totalorder %v169, 32
      %vm180 = vmor %vm176, %vm179
      %vm181 = vcmp.eq.s32.totalorder %v169, 47
      %vm182 = vmor %vm178, %vm181
      %vm183 = vcmp.eq.s32.totalorder %v171, 0
      %vm184 = vcmp.eq.s32.totalorder %v172, 0
      %vm185 = vcmp.eq.s32.totalorder %v171, 15
      %vm186 = vcmp.eq.s32.totalorder %v172, 15
      %187 = vrot.lane.b32.xlu0 %v164, 127
      %v188 = vpop.permute.xlu0 %187
      %189 = vrot.lane.b32.xlu0 %v165, 127
      %v190 = vpop.permute.xlu0 %189
      %191 = vrot.lane.b32.xlu0 %v164, 1
      %v192 = vpop.permute.xlu0 %191
      %193 = vrot.lane.b32.xlu0 %v165, 1
      %v194 = vpop.permute.xlu0 %193
      %v195 = vsel %vm182, %v192, %v188
      %v196 = vsel %vm182, %v194, %v190
      %v197 = vsel %vm180, %v188, %v192
      %v198 = vsel %vm180, %v190, %v194
      %v199 = vadd.f32 %v197, %v164
      %v200 = vadd.f32 %v198, %v165
      %v201 = vadd.f32 %v199, %v195
      %v202 = vadd.f32 %v200, %v196
      %v203 = vrot.slane %v201, 1
      %v204 = vrot.slane %v202, 1
      %vm205 = vcmp.lt.s32.totalorder %v171, 7
      %v206 = vsel %vm205, %v203, %v204
      %v207 = vsel %vm205, %v204, %v203
      %v208 = vrot.slane %v201, 7
      %v209 = vrot.slane %v202, 7
      %vm210 = vcmp.lt.s32.totalorder %v171, 1
      %v211 = vsel %vm210, %v208, %v209
      %v212 = vsel %vm210, %v209, %v208
      %v213 = vsel %vm185, %v212, %v206
      %v214 = vsel %vm186, %v211, %v207
      %v215 = vsel %vm183, %v206, %v212
      %v216 = vsel %vm184, %v207, %v211
      %v217 = vadd.f32 %v215, %v201
      %v218 = vadd.f32 %v216, %v202
      %v219 = vadd.f32 %v217, %v213
      %v220 = vadd.f32 %v218, %v214
      %v221 = vmul.f32 %v219, 0.11111111
      %v222 = vmul.f32 %v220, 0.11111111
      %223 = vrot.lane.b32.xlu0 %v166, 127
      %v224 = vpop.permute.xlu0 %223
      %225 = vrot.lane.b32.xlu0 %v167, 127
      %v226 = vpop.permute.xlu0 %225
      %227 = vrot.lane.b32.xlu0 %v166, 1
      %v228 = vpop.permute.xlu0 %227
      %229 = vrot.lane.b32.xlu0 %v167, 1
      %v230 = vpop.permute.xlu0 %229
      %v231 = vsel %vm182, %v228, %v224
      %v232 = vsel %vm182, %v230, %v226
      %v233 = vsel %vm180, %v224, %v228
      %v234 = vsel %vm180, %v226, %v230
      %v235 = vadd.f32 %v233, %v166
      %v236 = vadd.f32 %v234, %v167
      %v237 = vadd.f32 %v235, %v231
      %v238 = vadd.f32 %v236, %v232
      %v239 = vrot.slane %v237, 1
      %v240 = vrot.slane %v238, 1
      %v241 = vsel %vm205, %v239, %v240
      %v242 = vsel %vm205, %v240, %v239
      %v243 = vrot.slane %v237, 7
      %v244 = vrot.slane %v238, 7
      %v245 = vsel %vm210, %v243, %v244
      %v246 = vsel %vm210, %v244, %v243
      %v247 = vsel %vm185, %v246, %v241
      %v248 = vsel %vm186, %v245, %v242
      %v249 = vsel %vm183, %v241, %v246
      %v250 = vsel %vm184, %v242, %v245
      %v251 = vadd.f32 %v249, %v237
      %v252 = vadd.f32 %v250, %v238
      %v253 = vadd.f32 %v251, %v247
      %v254 = vadd.f32 %v252, %v248
      %v255 = vmul.f32 %v253, 0.11111111
      %v256 = vmul.f32 %v254, 0.11111111
      %v257 = vmul.f32 %v221, %v221
      %v258 = vmul.f32 %v222, %v222
      %v259 = vmul.f32 %v255, %v255
      %v260 = vmul.f32 %v256, %v256
      %v261 = vmul.f32 %v221, %v255
      %v262 = vmul.f32 %v222, %v256
      %v263 = vmul.f32 %v164, %v164
      %v264 = vmul.f32 %v165, %v165
      %265 = vrot.lane.b32.xlu0 %v263, 127
      %v266 = vpop.permute.xlu0 %265
      %267 = vrot.lane.b32.xlu0 %v264, 127
      %v268 = vpop.permute.xlu0 %267
      %269 = vrot.lane.b32.xlu0 %v263, 1
      %v270 = vpop.permute.xlu0 %269
      %271 = vrot.lane.b32.xlu0 %v264, 1
      %v272 = vpop.permute.xlu0 %271
      %v273 = vsel %vm182, %v270, %v266
      %v274 = vsel %vm182, %v272, %v268
      %v275 = vsel %vm180, %v266, %v270
      %v276 = vsel %vm180, %v268, %v272
      %v277 = vadd.f32 %v275, %v263
      %v278 = vadd.f32 %v276, %v264
      %v279 = vadd.f32 %v277, %v273
      %v280 = vadd.f32 %v278, %v274
      %v281 = vrot.slane %v279, 1
      %v282 = vrot.slane %v280, 1
      %v283 = vsel %vm205, %v281, %v282
      %v284 = vsel %vm205, %v282, %v281
      %v285 = vrot.slane %v279, 7
      %v286 = vrot.slane %v280, 7
      %v287 = vsel %vm210, %v285, %v286
      %v288 = vsel %vm210, %v286, %v285
      %v289 = vsel %vm185, %v288, %v283
      %v290 = vsel %vm186, %v287, %v284
      %v291 = vsel %vm183, %v283, %v288
      %v292 = vsel %vm184, %v284, %v287
      %v293 = vadd.f32 %v291, %v279
      %v294 = vadd.f32 %v292, %v280
      %v295 = vadd.f32 %v293, %v289
      %v296 = vadd.f32 %v294, %v290
      %v297 = vmul.f32 %v295, 0.11111111
      %v298 = vmul.f32 %v296, 0.11111111
      %v299 = vsub.f32 %v297, %v257
      %v300 = vsub.f32 %v298, %v258
      %v301 = vmul.f32 %v166, %v166
      %v302 = vmul.f32 %v167, %v167
      %303 = vrot.lane.b32.xlu0 %v301, 127
      %v304 = vpop.permute.xlu0 %303
      %305 = vrot.lane.b32.xlu0 %v302, 127
      %v306 = vpop.permute.xlu0 %305
      %307 = vrot.lane.b32.xlu0 %v301, 1
      %v308 = vpop.permute.xlu0 %307
      %309 = vrot.lane.b32.xlu0 %v302, 1
      %v310 = vpop.permute.xlu0 %309
      %v311 = vsel %vm182, %v308, %v304
      %v312 = vsel %vm182, %v310, %v306
      %v313 = vsel %vm180, %v304, %v308
      %v314 = vsel %vm180, %v306, %v310
      %v315 = vadd.f32 %v313, %v301
      %v316 = vadd.f32 %v314, %v302
      %v317 = vadd.f32 %v315, %v311
      %v318 = vadd.f32 %v316, %v312
      %v319 = vrot.slane %v317, 1
      %v320 = vrot.slane %v318, 1
      %v321 = vsel %vm205, %v319, %v320
      %v322 = vsel %vm205, %v320, %v319
      %v323 = vrot.slane %v317, 7
      %v324 = vrot.slane %v318, 7
      %v325 = vsel %vm210, %v323, %v324
      %v326 = vsel %vm210, %v324, %v323
      %v327 = vsel %vm185, %v326, %v321
      %v328 = vsel %vm186, %v325, %v322
      %v329 = vsel %vm183, %v321, %v326
      %v330 = vsel %vm184, %v322, %v325
      %v331 = vadd.f32 %v329, %v317
      %v332 = vadd.f32 %v330, %v318
      %v333 = vadd.f32 %v331, %v327
      %v334 = vadd.f32 %v332, %v328
      %v335 = vmul.f32 %v333, 0.11111111
      %v336 = vmul.f32 %v334, 0.11111111
      %v337 = vsub.f32 %v335, %v259
      %v338 = vsub.f32 %v336, %v260
      %v339 = vmul.f32 %v164, %v166
      %v340 = vmul.f32 %v165, %v167
      %341 = vrot.lane.b32.xlu0 %v339, 127
      %v342 = vpop.permute.xlu0 %341
      %343 = vrot.lane.b32.xlu0 %v340, 127
      %v344 = vpop.permute.xlu0 %343
      %345 = vrot.lane.b32.xlu0 %v339, 1
      %v346 = vpop.permute.xlu0 %345
      %347 = vrot.lane.b32.xlu0 %v340, 1
      %v348 = vpop.permute.xlu0 %347
      %v349 = vsel %vm182, %v346, %v342
      %v350 = vsel %vm182, %v348, %v344
      %v351 = vsel %vm180, %v342, %v346
      %v352 = vsel %vm180, %v344, %v348
      %v353 = vadd.f32 %v351, %v339
      %v354 = vadd.f32 %v352, %v340
      %v355 = vadd.f32 %v353, %v349
      %v356 = vadd.f32 %v354, %v350
      %v357 = vrot.slane %v355, 1
      %v358 = vrot.slane %v356, 1
      %v359 = vsel %vm205, %v357, %v358
      %v360 = vsel %vm205, %v358, %v357
      %v361 = vrot.slane %v355, 7
      %v362 = vrot.slane %v356, 7
      %v363 = vsel %vm210, %v361, %v362
      %v364 = vsel %vm210, %v362, %v361
      %v365 = vsel %vm185, %v364, %v359
      %v366 = vsel %vm186, %v363, %v360
      %v367 = vsel %vm183, %v359, %v364
      %v368 = vsel %vm184, %v360, %v363
      %v369 = vadd.f32 %v367, %v355
      %v370 = vadd.f32 %v368, %v356
      %v371 = vadd.f32 %v369, %v365
      %v372 = vadd.f32 %v370, %v366
      %v373 = vmul.f32 %v371, 0.11111111
      %v374 = vmul.f32 %v372, 0.11111111
      %v375 = vsub.f32 %v373, %v261
      %v376 = vsub.f32 %v374, %v262
      %v377 = vmul.f32 %v375, 2.0
      %v378 = vmul.f32 %v376, 2.0
      %v379 = vadd.f32 %v377, 0.0009
      %v380 = vadd.f32 %v378, 0.0009
      %v381 = vadd.f32 %v299, %v337
      %v382 = vadd.f32 %v300, %v338
      %v383 = vadd.f32 %v381, 0.0009
      %v384 = vadd.f32 %v382, 0.0009
      %v385 = vmul.f32 %v261, 2.0
      %v386 = vmul.f32 %v262, 2.0
      %v387 = vadd.f32 %v385, 0.0001
      %v388 = vadd.f32 %v386, 0.0001
      %v389 = vmul.f32 %v387, %v379
      %v390 = vmul.f32 %v388, %v380
      %v391 = vadd.f32 %v257, %v259
      %v392 = vadd.f32 %v258, %v260
      %v393 = vadd.f32 %v391, 0.0001
      %v394 = vadd.f32 %v392, 0.0001
      %v395 = vmul.f32 %v393, %v383
      %v396 = vmul.f32 %v394, %v384
      %v397 = vrcp.pop %v395
      %v398 = vrcp.pop %v396
      %v399 = vmul.f32 %v395, %v397
      %v400 = vmul.f32 %v396, %v398
      %v401 = vsub.f32 2.0, %v399
      %v402 = vsub.f32 2.0, %v400
      %v403 = vmul.f32 %v397, %v401
      %v404 = vmul.f32 %v398, %v402
      %v405 = vmul.f32 %v389, %v403
      %v406 = vmul.f32 %v390, %v404
      %v407 = vsub.f32 1.0, %v405
      %v408 = vsub.f32 1.0, %v406
      %v409 = vmul.f32 %v407, 0.5
      %v410 = vmul.f32 %v408, 0.5
      %v411 = vmax.f32 %v409, 0.0
      %v412 = vmax.f32 %v410, 0.0
      %v413 = vmin.f32 %v411, 1.0
      %v414 = vmin.f32 %v412, 1.0
      %v415 = vsub.f32 %v164, %v166
      %v416 = vsub.f32 %v165, %v167
      %v417 = vand.u32 2147483647, %v415
      %v418 = vand.u32 2147483647, %v416
      %v419 = vmul.f32 %v413, 0.1
      %v420 = vmul.f32 %v414, 0.1
      %v421 = vmul.f32 %v417, 0.9
      %v422 = vmul.f32 %v418, 0.9
      %v423 = vadd.f32 %v419, %v421
      %v424 = vadd.f32 %v420, %v422
      %425 = vst [vmem:[%s163] sm:$0xff] %v423
      %426 = vst [vmem:[%s163 + $0x8] sm:$0xff] %v424
      %p427 = scmp.lt.s32.totalorder %s13, 1
      %s428 = scalar_select %p427, %s13, 1
      %s429 = smul.addr %s428, 2
      %s430 = smul.addr %s429, 8
      %s431 = scalar_lea.vmem %s2, %s430
      // Predicated region
      $region29: #{photometric_map.1} parent=27 // pred_check
        %p432 = pneg %p83
      $region30: #{photometric_map.1} parent=27 // pred_check_branch
        %434 = sbr.rel (%p432) target = $region32
      $region31: #{photometric_map.1} parent=27 // pred_region
        _
      $region32: #{photometric_map.1} parent=27 // pred_fallthru
        _
    $region28: #{photometric_map.1} parent=5 // pred_fallthru
      _
    %p435 = scmp.le.s32.totalorder 2, %s8
    // Predicated region
    $region33: #{photometric_map.1} parent=5 // pred_check
      %p436 = pneg %p435
    $region34: #{photometric_map.1} parent=5 // pred_check_branch
      %438 = sbr.rel (%p436) target = $region36
    $region35: #{photometric_map.1} parent=5 // pred_region
      %s439 = ssub.s32 %s8, 2
      // Predicated region
      $region37: #{photometric_map.1} parent=35 // pred_check
        %p440 = pneg %p89
      $region38: #{photometric_map.1} parent=35 // pred_check_branch
        %442 = sbr.rel (%p440) target = $region40
      $region39: #{photometric_map.1} parent=35 // pred_region
        %p443 = scmp.lt.s32.totalorder %s14, 1
        %s444 = scalar_select %p443, %s14, 1
        %s445 = smul.addr %s444, 2
        %s446 = smul.addr %s445, 8
        %s447 = scalar_lea.vmem %s2, %s446
      $region40: #{photometric_map.1} parent=35 // pred_fallthru
        _
    $region36: #{photometric_map.1} parent=5 // pred_fallthru
      _
  $region6: #{photometric_map.1} parent=0 // loop_footer
    %s12 = sadd.s32 1, %s8
  $region7: #{photometric_map.1} parent=0 // loop_footer_branch
    %7 = sbr.rel target = $region3
  $region8: #{photometric_map.1} parent=0 // loop_exit
    _

</llo_original>
